<compile_context>
chip_gen: v7x
topology: tpu7x:2x2x1
jax: 0.10.0
libtpu: 0.0.40
codegen_flags: <defaults>
</compile_context>

<pallas_src>
import functools

import jax
import jax.numpy as jnp
from jax import lax
from jax.experimental import pallas as pl
from jax.experimental.pallas import tpu as pltpu


def _mhsa_kernel(x_ref, wqkv_ref, wo_ref, bo_ref, o_ref, buf_ref,
                 *, heads, head_dim):
    """One grid step == one batch element.

    x_ref    : (1, N, D)   input block
    wqkv_ref : (D, 3D)     fused QKV weight (transposed, Q cols pre-scaled)
    wo_ref   : (D, D)      output-projection weight (transposed)
    bo_ref   : (1, D)      output bias
    o_ref    : (1, N, D)   output block
    buf_ref  : (N, D)      VMEM scratch for concat_h(out_h)
    """
    D = heads * head_dim

    x = x_ref[0]                                                      # (N, D)

    # Fused QKV projection: one wide MXU matmul (scale already folded into Q).
    qkv = jnp.dot(x, wqkv_ref[...], preferred_element_type=jnp.float32)  # (N, 3D)
    q = qkv[:, 0 * D:1 * D]
    k = qkv[:, 1 * D:2 * D]
    v = qkv[:, 2 * D:3 * D]

    # TODO(synk): for large N, tile the sequence (flash-attention style online
    # softmax over kv tiles) so the (N, N) score tile stays VMEM-bounded; at
    # harness sizes a whole-sequence score tile is fine.
    # TODO(synk): for production on v6e/v7x, cast MXU inputs (x/weights/attn)
    # to bfloat16 with f32 accumulation; kept f32 here to match the harness.
    for h in range(heads):                       # static, unrolled head loop
        lo, hi = h * head_dim, (h + 1) * head_dim
        qh = q[:, lo:hi]                         # (N, d)
        kh = k[:, lo:hi]                         # (N, d)
        vh = v[:, lo:hi]                         # (N, d)

        # q @ k^T without materializing k.T: contract last dims of both.
        s = lax.dot_general(qh, kh, (((1,), (1,)), ((), ())),
                            preferred_element_type=jnp.float32)       # (N, N)
        s = s - jnp.max(s, axis=-1, keepdims=True)
        p = jnp.exp(s)
        inv = pl.reciprocal(jnp.sum(p, axis=-1, keepdims=True), approx=True)
        attn = p * inv                                                # softmax

        # h-th d-wide column slice of the concat buffer.
        buf_ref[:, lo:hi] = jnp.dot(attn, vh,
                                    preferred_element_type=jnp.float32)

    # Single wide output projection + bias: (N, D) @ (D, D).
    out = jnp.dot(buf_ref[...], wo_ref[...],
                  preferred_element_type=jnp.float32)
    o_ref[0] = (out + bo_ref[...]).astype(o_ref.dtype)


def multi_head_self_attention(x, w_qkv, w_out, b_out, heads):
    """x: (B, N, D) float32.
    w_qkv: (3D, D) torch Linear weight (to_qkv, bias=False).
    w_out: (D, D), b_out: (D,) torch Linear weight/bias (to_out).
    Returns (B, N, D)."""
    B, N, D = x.shape
    assert D % heads == 0
    d = D // heads
    scale = float(D) ** -0.5   # matches the torch module: dim ** (-0.5)

    # --- plain-JAX glue: torch Linear computes y = x @ W.T ------------------
    w_qkv_t = jnp.transpose(w_qkv).astype(jnp.float32)        # (D, 3D) cols [q|k|v]
    # Fold the softmax scale into the Q projection columns (removes the (N,N)
    # elementwise scale from the kernel entirely).
    col_scale = jnp.concatenate([jnp.full((D,), scale, jnp.float32),
                                 jnp.ones((2 * D,), jnp.float32)])
    w_qkv_t = w_qkv_t * col_scale[None, :]
    w_out_t = jnp.transpose(w_out).astype(jnp.float32)        # (D, D)
    bo = b_out.reshape(1, D).astype(jnp.float32)

    kernel = functools.partial(_mhsa_kernel, heads=heads, head_dim=d)

    return pl.pallas_call(
        kernel,
        out_shape=jax.ShapeDtypeStruct((B, N, D), x.dtype),
        grid_spec=pltpu.PrefetchScalarGridSpec(
            num_scalar_prefetch=0,
            grid=(B,),
            in_specs=[
                pl.BlockSpec((1, N, D), lambda b: (b, 0, 0)),   # x (per batch)
                pl.BlockSpec((D, 3 * D), lambda b: (0, 0)),     # W_qkv^T (resident)
                pl.BlockSpec((D, D), lambda b: (0, 0)),         # W_out^T (resident)
                pl.BlockSpec((1, D), lambda b: (0, 0)),         # bias
            ],
            out_specs=pl.BlockSpec((1, N, D), lambda b: (b, 0, 0)),
            scratch_shapes=[pltpu.VMEM((N, D), jnp.float32)],
        ),
        compiler_params=pltpu.CompilerParams(
            dimension_semantics=("parallel",)),
    )(x, w_qkv_t, w_out_t, bo)


def _reference(x, w_qkv, w_out, b_out, heads):
    B, N, D = x.shape
    d = D // heads
    scale = float(D) ** -0.5
    qkv = x @ w_qkv.T                                  # (B, N, 3D)
    qkv = qkv.reshape(B, N, 3, heads, d)               # (b n qkv h d)
    qkv = jnp.transpose(qkv, (2, 0, 3, 1, 4))          # (qkv b h n d)
    q, k, v = qkv[0], qkv[1], qkv[2]
    dots = jnp.einsum('bhid,bhjd->bhij', q, k) * scale
    attn = jax.nn.softmax(dots, axis=-1)
    out = jnp.einsum('bhij,bhjd->bhid', attn, v)
    out = jnp.transpose(out, (0, 2, 1, 3)).reshape(B, N, D)
    return out @ w_out.T + b_out


if __name__ == "__main__":
    B, N, D, H = 2, 8, 32, 4

    key = jax.random.PRNGKey(0)
    kx, kqkv, kwo, kbo = jax.random.split(key, 4)
    x = jax.random.normal(kx, (B, N, D), dtype=jnp.float32)
    w_qkv = jax.random.normal(kqkv, (3 * D, D), dtype=jnp.float32) * 0.1
    w_out = jax.random.normal(kwo, (D, D), dtype=jnp.float32) * 0.1
    b_out = jax.random.normal(kbo, (D,), dtype=jnp.float32) * 0.1

    out = multi_head_self_attention(x, w_qkv, w_out, b_out, heads=H)
    out = jax.block_until_ready(out)

    ref = _reference(x, w_qkv, w_out, b_out, heads=H)
    assert out.shape == (B, N, D)
    # Tolerance accounts for the approx (EUP) reciprocal in the softmax.
    assert jnp.allclose(out, ref, atol=1e-3, rtol=1e-3), "mismatch vs reference"

    print("KERNEL_OK")
</pallas_src>

<mosaic_0001>
module attributes {stable_mosaic.version = 11 : i64} {
  func.func @_mhsa_kernel(%arg0: i32, %arg1: memref<1x8x32xf32, #tpu.memory_space<vmem>>, %arg2: memref<32x96xf32, #tpu.memory_space<vmem>>, %arg3: memref<32x32xf32, #tpu.memory_space<vmem>>, %arg4: memref<1x32xf32, #tpu.memory_space<vmem>>, %arg5: memref<1x8x32xf32, #tpu.memory_space<vmem>>, %arg6: memref<8x32xf32, #tpu.memory_space<vmem>>) attributes {dimension_semantics = [#tpu.dimension_semantics<parallel>], iteration_bounds = array<i64: 2>, scalar_prefetch = 0 : i64, scratch_operands = 1 : i64, tpu.core_type = #tpu.core_type<tc>, window_params = [{transform_indices = @transform_0, window_bounds = array<i64: 1, 8, 32>}, {pipeline_mode = #tpu.pipeline_mode<synchronous>, transform_indices = @transform_1, window_bounds = array<i64: 32, 96>}, {pipeline_mode = #tpu.pipeline_mode<synchronous>, transform_indices = @transform_2, window_bounds = array<i64: 32, 32>}, {pipeline_mode = #tpu.pipeline_mode<synchronous>, transform_indices = @transform_3, window_bounds = array<i64: 1, 32>}, {transform_indices = @transform_4, window_bounds = array<i64: 1, 8, 32>}]} {
    %c0 = arith.constant 0 : index
    %c0_0 = arith.constant 0 : index
    %c0_1 = arith.constant 0 : index
    %0 = vector.load %arg1[%c0, %c0_0, %c0_1] : memref<1x8x32xf32, #tpu.memory_space<vmem>>, vector<1x8x32xf32>
    %1 = vector.shape_cast %0 : vector<1x8x32xf32> to vector<8x32xf32>
    %c0_2 = arith.constant 0 : index
    %c0_3 = arith.constant 0 : index
    %2 = vector.load %arg2[%c0_2, %c0_3] : memref<32x96xf32, #tpu.memory_space<vmem>>, vector<32x96xf32>
    %cst = arith.constant dense<0.000000e+00> : vector<8x96xf32>
    %3 = tpu.matmul %1, %2, %cst {dimension_numbers = #tpu.dot_dimension_numbers<[1], [0], [0], [1], [0, 0, 1, 1], [], []>} : vector<8x32xf32>, vector<32x96xf32>, vector<8x96xf32> -> vector<8x96xf32>
    %4 = vector.extract_strided_slice %3 {offsets = [0, 0], sizes = [8, 32], strides = [1, 1]} : vector<8x96xf32> to vector<8x32xf32>
    %5 = vector.extract_strided_slice %3 {offsets = [0, 32], sizes = [8, 32], strides = [1, 1]} : vector<8x96xf32> to vector<8x32xf32>
    %6 = vector.extract_strided_slice %3 {offsets = [0, 64], sizes = [8, 32], strides = [1, 1]} : vector<8x96xf32> to vector<8x32xf32>
    %7 = vector.extract_strided_slice %4 {offsets = [0, 0], sizes = [8, 8], strides = [1, 1]} : vector<8x32xf32> to vector<8x8xf32>
    %8 = vector.extract_strided_slice %5 {offsets = [0, 0], sizes = [8, 8], strides = [1, 1]} : vector<8x32xf32> to vector<8x8xf32>
    %9 = vector.extract_strided_slice %6 {offsets = [0, 0], sizes = [8, 8], strides = [1, 1]} : vector<8x32xf32> to vector<8x8xf32>
    %cst_4 = arith.constant dense<0.000000e+00> : vector<8x8xf32>
    %10 = tpu.matmul %7, %8, %cst_4 {dimension_numbers = #tpu.dot_dimension_numbers<[1], [1], [0], [0], [0, 0, 1, 0], [], []>} : vector<8x8xf32>, vector<8x8xf32>, vector<8x8xf32> -> vector<8x8xf32>
    %cst_5 = arith.constant dense<0xFF800000> : vector<8xf32>
    %11 = vector.multi_reduction <maximumf>, %10, %cst_5 [1] : vector<8x8xf32> to vector<8xf32>
    %12 = vector.shape_cast %11 : vector<8xf32> to vector<8x1xf32>
    %13 = vector.broadcast %12 : vector<8x1xf32> to vector<8x8xf32>
    %14 = arith.subf %10, %13 : vector<8x8xf32>
    %15 = math.exp %14 : vector<8x8xf32>
    %cst_6 = arith.constant dense<0.000000e+00> : vector<8xf32>
    %16 = vector.multi_reduction <add>, %15, %cst_6 [1] : vector<8x8xf32> to vector<8xf32>
    %17 = vector.shape_cast %16 : vector<8xf32> to vector<8x1xf32>
    %18 = tpu.reciprocal %17 {approx = true} : vector<8x1xf32> -> vector<8x1xf32>
    %19 = vector.broadcast %18 : vector<8x1xf32> to vector<8x8xf32>
    %20 = arith.mulf %15, %19 : vector<8x8xf32>
    %cst_7 = arith.constant dense<0.000000e+00> : vector<8x8xf32>
    %21 = tpu.matmul %20, %9, %cst_7 {dimension_numbers = #tpu.dot_dimension_numbers<[1], [0], [0], [1], [0, 0, 1, 1], [], []>} : vector<8x8xf32>, vector<8x8xf32>, vector<8x8xf32> -> vector<8x8xf32>
    %c0_8 = arith.constant 0 : index
    %c0_9 = arith.constant 0 : index
    %22 = vector.load %arg6[%c0_8, %c0_9] : memref<8x32xf32, #tpu.memory_space<vmem>>, vector<8x8xf32>
    tpu.vector_store %arg6[%c0_8, %c0_9], %21 {strides = array<i32>} : memref<8x32xf32, #tpu.memory_space<vmem>>, vector<8x8xf32>,
    %23 = vector.extract_strided_slice %4 {offsets = [0, 8], sizes = [8, 8], strides = [1, 1]} : vector<8x32xf32> to vector<8x8xf32>
    %24 = vector.extract_strided_slice %5 {offsets = [0, 8], sizes = [8, 8], strides = [1, 1]} : vector<8x32xf32> to vector<8x8xf32>
    %25 = vector.extract_strided_slice %6 {offsets = [0, 8], sizes = [8, 8], strides = [1, 1]} : vector<8x32xf32> to vector<8x8xf32>
    %cst_10 = arith.constant dense<0.000000e+00> : vector<8x8xf32>
    %26 = tpu.matmul %23, %24, %cst_10 {dimension_numbers = #tpu.dot_dimension_numbers<[1], [1], [0], [0], [0, 0, 1, 0], [], []>} : vector<8x8xf32>, vector<8x8xf32>, vector<8x8xf32> -> vector<8x8xf32>
    %cst_11 = arith.constant dense<0xFF800000> : vector<8xf32>
    %27 = vector.multi_reduction <maximumf>, %26, %cst_11 [1] : vector<8x8xf32> to vector<8xf32>
    %28 = vector.shape_cast %27 : vector<8xf32> to vector<8x1xf32>
    %29 = vector.broadcast %28 : vector<8x1xf32> to vector<8x8xf32>
    %30 = arith.subf %26, %29 : vector<8x8xf32>
    %31 = math.exp %30 : vector<8x8xf32>
    %cst_12 = arith.constant dense<0.000000e+00> : vector<8xf32>
    %32 = vector.multi_reduction <add>, %31, %cst_12 [1] : vector<8x8xf32> to vector<8xf32>
    %33 = vector.shape_cast %32 : vector<8xf32> to vector<8x1xf32>
    %34 = tpu.reciprocal %33 {approx = true} : vector<8x1xf32> -> vector<8x1xf32>
    %35 = vector.broadcast %34 : vector<8x1xf32> to vector<8x8xf32>
    %36 = arith.mulf %31, %35 : vector<8x8xf32>
    %cst_13 = arith.constant dense<0.000000e+00> : vector<8x8xf32>
    %37 = tpu.matmul %36, %25, %cst_13 {dimension_numbers = #tpu.dot_dimension_numbers<[1], [0], [0], [1], [0, 0, 1, 1], [], []>} : vector<8x8xf32>, vector<8x8xf32>, vector<8x8xf32> -> vector<8x8xf32>
    %c0_14 = arith.constant 0 : index
    %c8 = arith.constant 8 : index
    %38 = vector.load %arg6[%c0_14, %c8] : memref<8x32xf32, #tpu.memory_space<vmem>>, vector<8x8xf32>
    tpu.vector_store %arg6[%c0_14, %c8], %37 {strides = array<i32>} : memref<8x32xf32, #tpu.memory_space<vmem>>, vector<8x8xf32>,
    %39 = vector.extract_strided_slice %4 {offsets = [0, 16], sizes = [8, 8], strides = [1, 1]} : vector<8x32xf32> to vector<8x8xf32>
    %40 = vector.extract_strided_slice %5 {offsets = [0, 16], sizes = [8, 8], strides = [1, 1]} : vector<8x32xf32> to vector<8x8xf32>
    %41 = vector.extract_strided_slice %6 {offsets = [0, 16], sizes = [8, 8], strides = [1, 1]} : vector<8x32xf32> to vector<8x8xf32>
    %cst_15 = arith.constant dense<0.000000e+00> : vector<8x8xf32>
    %42 = tpu.matmul %39, %40, %cst_15 {dimension_numbers = #tpu.dot_dimension_numbers<[1], [1], [0], [0], [0, 0, 1, 0], [], []>} : vector<8x8xf32>, vector<8x8xf32>, vector<8x8xf32> -> vector<8x8xf32>
    %cst_16 = arith.constant dense<0xFF800000> : vector<8xf32>
    %43 = vector.multi_reduction <maximumf>, %42, %cst_16 [1] : vector<8x8xf32> to vector<8xf32>
    %44 = vector.shape_cast %43 : vector<8xf32> to vector<8x1xf32>
    %45 = vector.broadcast %44 : vector<8x1xf32> to vector<8x8xf32>
    %46 = arith.subf %42, %45 : vector<8x8xf32>
    %47 = math.exp %46 : vector<8x8xf32>
    %cst_17 = arith.constant dense<0.000000e+00> : vector<8xf32>
    %48 = vector.multi_reduction <add>, %47, %cst_17 [1] : vector<8x8xf32> to vector<8xf32>
    %49 = vector.shape_cast %48 : vector<8xf32> to vector<8x1xf32>
    %50 = tpu.reciprocal %49 {approx = true} : vector<8x1xf32> -> vector<8x1xf32>
    %51 = vector.broadcast %50 : vector<8x1xf32> to vector<8x8xf32>
    %52 = arith.mulf %47, %51 : vector<8x8xf32>
    %cst_18 = arith.constant dense<0.000000e+00> : vector<8x8xf32>
    %53 = tpu.matmul %52, %41, %cst_18 {dimension_numbers = #tpu.dot_dimension_numbers<[1], [0], [0], [1], [0, 0, 1, 1], [], []>} : vector<8x8xf32>, vector<8x8xf32>, vector<8x8xf32> -> vector<8x8xf32>
    %c0_19 = arith.constant 0 : index
    %c16 = arith.constant 16 : index
    %54 = vector.load %arg6[%c0_19, %c16] : memref<8x32xf32, #tpu.memory_space<vmem>>, vector<8x8xf32>
    tpu.vector_store %arg6[%c0_19, %c16], %53 {strides = array<i32>} : memref<8x32xf32, #tpu.memory_space<vmem>>, vector<8x8xf32>,
    %55 = vector.extract_strided_slice %4 {offsets = [0, 24], sizes = [8, 8], strides = [1, 1]} : vector<8x32xf32> to vector<8x8xf32>
    %56 = vector.extract_strided_slice %5 {offsets = [0, 24], sizes = [8, 8], strides = [1, 1]} : vector<8x32xf32> to vector<8x8xf32>
    %57 = vector.extract_strided_slice %6 {offsets = [0, 24], sizes = [8, 8], strides = [1, 1]} : vector<8x32xf32> to vector<8x8xf32>
    %cst_20 = arith.constant dense<0.000000e+00> : vector<8x8xf32>
    %58 = tpu.matmul %55, %56, %cst_20 {dimension_numbers = #tpu.dot_dimension_numbers<[1], [1], [0], [0], [0, 0, 1, 0], [], []>} : vector<8x8xf32>, vector<8x8xf32>, vector<8x8xf32> -> vector<8x8xf32>
    %cst_21 = arith.constant dense<0xFF800000> : vector<8xf32>
    %59 = vector.multi_reduction <maximumf>, %58, %cst_21 [1] : vector<8x8xf32> to vector<8xf32>
    %60 = vector.shape_cast %59 : vector<8xf32> to vector<8x1xf32>
    %61 = vector.broadcast %60 : vector<8x1xf32> to vector<8x8xf32>
    %62 = arith.subf %58, %61 : vector<8x8xf32>
    %63 = math.exp %62 : vector<8x8xf32>
    %cst_22 = arith.constant dense<0.000000e+00> : vector<8xf32>
    %64 = vector.multi_reduction <add>, %63, %cst_22 [1] : vector<8x8xf32> to vector<8xf32>
    %65 = vector.shape_cast %64 : vector<8xf32> to vector<8x1xf32>
    %66 = tpu.reciprocal %65 {approx = true} : vector<8x1xf32> -> vector<8x1xf32>
    %67 = vector.broadcast %66 : vector<8x1xf32> to vector<8x8xf32>
    %68 = arith.mulf %63, %67 : vector<8x8xf32>
    %cst_23 = arith.constant dense<0.000000e+00> : vector<8x8xf32>
    %69 = tpu.matmul %68, %57, %cst_23 {dimension_numbers = #tpu.dot_dimension_numbers<[1], [0], [0], [1], [0, 0, 1, 1], [], []>} : vector<8x8xf32>, vector<8x8xf32>, vector<8x8xf32> -> vector<8x8xf32>
    %c0_24 = arith.constant 0 : index
    %c24 = arith.constant 24 : index
    %70 = vector.load %arg6[%c0_24, %c24] : memref<8x32xf32, #tpu.memory_space<vmem>>, vector<8x8xf32>
    tpu.vector_store %arg6[%c0_24, %c24], %69 {strides = array<i32>} : memref<8x32xf32, #tpu.memory_space<vmem>>, vector<8x8xf32>,
    %c0_25 = arith.constant 0 : index
    %c0_26 = arith.constant 0 : index
    %71 = vector.load %arg6[%c0_25, %c0_26] : memref<8x32xf32, #tpu.memory_space<vmem>>, vector<8x32xf32>
    %c0_27 = arith.constant 0 : index
    %c0_28 = arith.constant 0 : index
    %72 = vector.load %arg3[%c0_27, %c0_28] : memref<32x32xf32, #tpu.memory_space<vmem>>, vector<32x32xf32>
    %cst_29 = arith.constant dense<0.000000e+00> : vector<8x32xf32>
    %73 = tpu.matmul %71, %72, %cst_29 {dimension_numbers = #tpu.dot_dimension_numbers<[1], [0], [0], [1], [0, 0, 1, 1], [], []>} : vector<8x32xf32>, vector<32x32xf32>, vector<8x32xf32> -> vector<8x32xf32>
    %c0_30 = arith.constant 0 : index
    %c0_31 = arith.constant 0 : index
    %74 = vector.load %arg4[%c0_30, %c0_31] : memref<1x32xf32, #tpu.memory_space<vmem>>, vector<1x32xf32>
    %75 = vector.broadcast %74 : vector<1x32xf32> to vector<8x32xf32>
    %76 = arith.addf %73, %75 : vector<8x32xf32>
    %c0_32 = arith.constant 0 : index
    %c0_33 = arith.constant 0 : index
    %c0_34 = arith.constant 0 : index
    %77 = vector.load %arg5[%c0_32, %c0_33, %c0_34] : memref<1x8x32xf32, #tpu.memory_space<vmem>>, vector<1x8x32xf32>
    %78 = vector.shape_cast %77 : vector<1x8x32xf32> to vector<8x32xf32>
    %79 = vector.shape_cast %76 : vector<8x32xf32> to vector<1x8x32xf32>
    tpu.vector_store %arg5[%c0_32, %c0_33, %c0_34], %79 {strides = array<i32>} : memref<1x8x32xf32, #tpu.memory_space<vmem>>, vector<1x8x32xf32>,
    return
  }
  func.func @transform_0(%arg0: i32) -> (i32, i32, i32) {
    %c0_i32 = arith.constant 0 : i32
    %c0_i32_0 = arith.constant 0 : i32
    %c0_i32_1 = arith.constant 0 : i32
    return %arg0, %c0_i32, %c0_i32_0 : i32, i32, i32
  }
  func.func @transform_1(%arg0: i32) -> (i32, i32) {
    %c0_i32 = arith.constant 0 : i32
    %c0_i32_0 = arith.constant 0 : i32
    %c0_i32_1 = arith.constant 0 : i32
    return %c0_i32, %c0_i32_0 : i32, i32
  }
  func.func @transform_2(%arg0: i32) -> (i32, i32) {
    %c0_i32 = arith.constant 0 : i32
    %c0_i32_0 = arith.constant 0 : i32
    %c0_i32_1 = arith.constant 0 : i32
    return %c0_i32, %c0_i32_0 : i32, i32
  }
  func.func @transform_3(%arg0: i32) -> (i32, i32) {
    %c0_i32 = arith.constant 0 : i32
    %c0_i32_0 = arith.constant 0 : i32
    %c0_i32_1 = arith.constant 0 : i32
    return %c0_i32, %c0_i32_0 : i32, i32
  }
  func.func @transform_4(%arg0: i32) -> (i32, i32, i32) {
    %c0_i32 = arith.constant 0 : i32
    %c0_i32_0 = arith.constant 0 : i32
    %c0_i32_1 = arith.constant 0 : i32
    return %arg0, %c0_i32, %c0_i32_0 : i32, i32, i32
  }
}

</mosaic_0001>

<llo_original>
// kernel: tpu_custom_call.1
$region0: #{tpu_custom_call.1}
  #allocation0 [shape = 'u32[]', space=smem, size = 0x4, offset = 0x4, fixed_abs, tag = 'smem constant byte address 0x4 - core index']
  #allocation1 [shape = 'u32[144,128]{1,0:T(1,128)}', space=vmem, size = 0x12000, scoped, tag = 'internal scratch']
  #allocation2 [shape = 'f32[8,32]{1,0:T(8,128)}', space=vmem, size = 0x1000, scoped, tag = 'scratch operand']
  %s0 = inlined_call_operand.hbm [shape: f32[2,8,32], index: 0, kind: input, shape index: {}]
  %s1 = inlined_call_operand.hbm [shape: f32[32,96], index: 1, kind: input, shape index: {}]
  %s2 = inlined_call_operand.hbm [shape: f32[32,32], index: 2, kind: input, shape index: {}]
  %s3 = inlined_call_operand.vmem [shape: f32[1,32], index: 3, kind: input, shape index: {}]
  %s4 = inlined_call_operand.hbm [shape: f32[2,8,32], index: 4, kind: output, shape index: {}]
  %s5 = sld [smem:[#allocation0]]
  $region61: #{tpu_custom_call.1} parent=0
    _
  %s7 = ssub.s32 1, %s5
  %s8 = scalar_select 0, %s7, %s5
  $region1: #{tpu_custom_call.1} parent=0
    #allocation3 [shape = 'u8[8192]{0}', space=vmem, size = 0x2000, scoped, tag = 'input window, operand 0']
    #allocation4 [shape = 's32[2]{0}', space=sflag, size = 0x8, scoped, tag = 'scoped memory for tpu_custom_call.1']
    #allocation5 [shape = 's32[2]{0}', space=sflag, size = 0x8, scoped, tag = 'scoped memory for tpu_custom_call.1']
    #allocation6 [shape = 'u8[16384]{0}', space=vmem, size = 0x4000, scoped, tag = 'input window, operand 1, single buffered']
    #allocation7 [shape = 's32[1]{0}', space=sflag, size = 0x4, scoped, tag = 'scoped memory for tpu_custom_call.1']
    #allocation8 [shape = 'u8[16384]{0}', space=vmem, size = 0x4000, scoped, tag = 'input window, operand 2, single buffered']
    #allocation9 [shape = 'u8[8192]{0}', space=vmem, size = 0x2000, scoped, tag = 'output window, operand 0']
    %9 = vsyncpa [#allocation4], 0
    %s10 = scalar_lea.sflag [#allocation4], 1
    %11 = vsyncpa %s10, 0
    %12 = vsyncpa [#allocation7], 0
    %13 = vsyncpa [#allocation5], 0
    %s14 = scalar_lea.sflag [#allocation5], 1
    %15 = vsyncpa %s14, 0
    loop: start=0, step=1, limit=4
    $region2: #{tpu_custom_call.1} parent=1 // loop_pre_header
      _
    $region3: #{tpu_custom_call.1} parent=1 // loop_header
      %s17 = sphi 0, %s21
      %p18 = scmp.ge.s32.totalorder %s17, 4
      %s27 = sphi 0, %s29
      %s30 = sphi 0, %s27
      %s31 = sphi 0, %s30
      %s47 = sphi 0, %s31
      %s51 = sphi 0, %s51
      %s53 = sphi 0, %s51
      %s54 = sphi 0, %s53
      %s68 = sphi 0, %s54
      %s72 = sphi 0, %s72
      %s74 = sphi 0, %s72
      %s75 = sphi 0, %s74
      %s89 = sphi 0, %s75
      %s93 = sphi 0, %s93
      %s95 = sphi 0, %s93
      %s96 = sphi 0, %s95
      %s110 = sphi 0, %s96
      %s116 = sphi 0, %s118
      %s119 = sphi 0, %s116
      %s120 = sphi 0, %s119
      %s136 = sphi 0, %s120
    $region4: #{tpu_custom_call.1} parent=1 // loop_header_branch
      %20 = sbr.rel (%p18) target = $region8
    $region5: #{tpu_custom_call.1} parent=1 // loop_body
      %s22 = ssub.s32 %s17, 1
      %s23 = ssub.s32 %s17, 2
      %s24 = sadd.s32 %s17, 1
      %s25 = ssub.s32 %s17, %s24
      %p26 = scmp.eq.s32.totalorder %s25, 0
      %s28 = sadd.s32 %s27, 1
      %s29 = scalar_select %p26, %s27, %s28
      %p32 = pneg %p26
      %p33 = scmp.eq.s32.totalorder %s17, 1
      %p34 = por %p32, %p33
      %p35 = scmp.ne.s32.totalorder %s27, %s30
      %p36 = scmp.eq.s32.totalorder %s17, 0
      %p37 = por %p35, %p36
      %p38 = scmp.ne.s32.totalorder %s27, %s30
      %p39 = scmp.eq.s32.totalorder %s22, 1
      %p40 = por %p38, %p39
      %p41 = scmp.ne.s32.totalorder %s30, %s31
      %p42 = scmp.eq.s32.totalorder %s22, 0
      %p43 = por %p41, %p42
      %p44 = scmp.ne.s32.totalorder %s30, %s31
      %p45 = scmp.eq.s32.totalorder %s23, 1
      %p46 = por %p44, %p45
      %p48 = scmp.ne.s32.totalorder %s31, %s47
      %p49 = scmp.eq.s32.totalorder %s23, 0
      %p50 = por %p48, %p49
      %s52 = sadd.s32 %s51, 1
      %p55 = scmp.eq.s32.totalorder %s17, 1
      %p56 = scmp.ne.s32.totalorder %s51, %s53
      %p57 = scmp.eq.s32.totalorder %s17, 0
      %p58 = por %p56, %p57
      %p59 = scmp.ne.s32.totalorder %s51, %s53
      %p60 = scmp.eq.s32.totalorder %s22, 1
      %p61 = por %p59, %p60
      %p62 = scmp.ne.s32.totalorder %s53, %s54
      %p63 = scmp.eq.s32.totalorder %s22, 0
      %p64 = por %p62, %p63
      %p65 = scmp.ne.s32.totalorder %s53, %s54
      %p66 = scmp.eq.s32.totalorder %s23, 1
      %p67 = por %p65, %p66
      %p69 = scmp.ne.s32.totalorder %s54, %s68
      %p70 = scmp.eq.s32.totalorder %s23, 0
      %p71 = por %p69, %p70
      %s73 = sadd.s32 %s72, 1
      %p76 = scmp.eq.s32.totalorder %s17, 1
      %p77 = scmp.ne.s32.totalorder %s72, %s74
      %p78 = scmp.eq.s32.totalorder %s17, 0
      %p79 = por %p77, %p78
      %p80 = scmp.ne.s32.totalorder %s72, %s74
      %p81 = scmp.eq.s32.totalorder %s22, 1
      %p82 = por %p80, %p81
      %p83 = scmp.ne.s32.totalorder %s74, %s75
      %p84 = scmp.eq.s32.totalorder %s22, 0
      %p85 = por %p83, %p84
      %p86 = scmp.ne.s32.totalorder %s74, %s75
      %p87 = scmp.eq.s32.totalorder %s23, 1
      %p88 = por %p86, %p87
      %p90 = scmp.ne.s32.totalorder %s75, %s89
      %p91 = scmp.eq.s32.totalorder %s23, 0
      %p92 = por %p90, %p91
      %s94 = sadd.s32 %s93, 1
      %p97 = scmp.eq.s32.totalorder %s17, 1
      %p98 = scmp.ne.s32.totalorder %s93, %s95
      %p99 = scmp.eq.s32.totalorder %s17, 0
      %p100 = por %p98, %p99
      %p101 = scmp.ne.s32.totalorder %s93, %s95
      %p102 = scmp.eq.s32.totalorder %s22, 1
      %p103 = por %p101, %p102
      %p104 = scmp.ne.s32.totalorder %s95, %s96
      %p105 = scmp.eq.s32.totalorder %s22, 0
      %p106 = por %p104, %p105
      %p107 = scmp.ne.s32.totalorder %s95, %s96
      %p108 = scmp.eq.s32.totalorder %s23, 1
      %p109 = por %p107, %p108
      %p111 = scmp.ne.s32.totalorder %s96, %s110
      %p112 = scmp.eq.s32.totalorder %s23, 0
      %p113 = por %p111, %p112
      %s114 = ssub.s32 %s17, %s24
      %p115 = scmp.eq.s32.totalorder %s114, 0
      %s117 = sadd.s32 %s116, 1
      %s118 = scalar_select %p115, %s116, %s117
      %p121 = pneg %p115
      %p122 = scmp.eq.s32.totalorder %s17, 1
      %p123 = por %p121, %p122
      %p124 = scmp.ne.s32.totalorder %s116, %s119
      %p125 = scmp.eq.s32.totalorder %s17, 0
      %p126 = por %p124, %p125
      %p127 = scmp.ne.s32.totalorder %s116, %s119
      %p128 = scmp.eq.s32.totalorder %s22, 1
      %p129 = por %p127, %p128
      %p130 = scmp.ne.s32.totalorder %s119, %s120
      %p131 = scmp.eq.s32.totalorder %s22, 0
      %p132 = por %p130, %p131
      %p133 = scmp.ne.s32.totalorder %s119, %s120
      %p134 = scmp.eq.s32.totalorder %s23, 1
      %p135 = por %p133, %p134
      %p137 = scmp.ne.s32.totalorder %s120, %s136
      %p138 = scmp.eq.s32.totalorder %s23, 0
      %p139 = por %p137, %p138
      %p140 = scmp.le.s32.totalorder 1, %s17
      %p141 = scmp.lt.s32.totalorder %s17, 3
      %p142 = pnand %p140, %p141
      %p143 = pneg %p142
      // Predicated region
      $region9: #{tpu_custom_call.1} parent=5 // pred_check
        _
      $region10: #{tpu_custom_call.1} parent=5 // pred_check_branch
        %145 = sbr.rel (%p142) target = $region12
      $region11: #{tpu_custom_call.1} parent=5 // pred_region
        %s146 = ssub.s32 %s17, 1
        // Predicated region
        $region13: #{tpu_custom_call.1} parent=11 // pred_check
          %p147 = pneg %p64
        $region14: #{tpu_custom_call.1} parent=11 // pred_check_branch
          %149 = sbr.rel (%p147) target = $region16
        $region15: #{tpu_custom_call.1} parent=11 // pred_region
          %s151 = ssub.s32 512, 512
          %152 = vsyncadd [#allocation7], %s151
          %s153 = sshll.u32 [#allocation6], 4
          %s154 = int_to_ptr.vmem [resolvable:$true] %s153
          %159 = dma.hbm_to_vmem [thread:$0]  %s1, 512, %s154, [#allocation7], 128, 128, 8
        $region16: #{tpu_custom_call.1} parent=11 // pred_fallthru
          _
        // Predicated region
        $region17: #{tpu_custom_call.1} parent=11 // pred_check
          %p160 = pneg %p85
        $region18: #{tpu_custom_call.1} parent=11 // pred_check_branch
          %162 = sbr.rel (%p160) target = $region20
        $region19: #{tpu_custom_call.1} parent=11 // pred_region
          %s164 = ssub.s32 512, 512
          %165 = vsyncadd [#allocation7], %s164
          %s166 = sshll.u32 [#allocation8], 4
          %s167 = int_to_ptr.vmem [resolvable:$true] %s166
          %172 = dma.hbm_to_vmem [thread:$0]  %s2, 512, %s167, [#allocation7], 128, 128, 8
        $region20: #{tpu_custom_call.1} parent=11 // pred_fallthru
          _
        // Predicated region
        $region21: #{tpu_custom_call.1} parent=11 // pred_check
          %p173 = pneg %p106
        $region22: #{tpu_custom_call.1} parent=11 // pred_check_branch
          %175 = sbr.rel (%p173) target = $region24
        $region23: #{tpu_custom_call.1} parent=11 // pred_region
          _
        $region24: #{tpu_custom_call.1} parent=11 // pred_fallthru
          _
      $region12: #{tpu_custom_call.1} parent=5 // pred_fallthru
        _
      %p176 = scmp.lt.s32.totalorder %s17, 2
      // Predicated region
      $region25: #{tpu_custom_call.1} parent=5 // pred_check
        %p177 = pneg %p176
      $region26: #{tpu_custom_call.1} parent=5 // pred_check_branch
        %179 = sbr.rel (%p177) target = $region28
      $region27: #{tpu_custom_call.1} parent=5 // pred_region
        // Predicated region
        $region29: #{tpu_custom_call.1} parent=27 // pred_check
          %p180 = pneg %p37
        $region30: #{tpu_custom_call.1} parent=27 // pred_check_branch
          %182 = sbr.rel (%p180) target = $region32
        $region31: #{tpu_custom_call.1} parent=27 // pred_region
          %s183 = sand.u32 %s27, 1
          %s184 = scalar_lea.sflag [#allocation4], %s183
          %s185 = sand.u32 %s27, 1
          %s186 = smul.addr %s185, 8
          %s187 = scalar_lea.vmem [#allocation3], %s186
          %s189 = ssub.s32 128, 128
          %190 = vsyncadd %s184, %s189
          %s191 = smul.addr %s17, 128
          %s192 = scalar_lea.hbm %s0, %s191
          %s194 = sshll.u32 %s187, 4
          %s195 = int_to_ptr.vmem [resolvable:$true] %s194
          %197 = dma.hbm_to_vmem [thread:$0]  %s192, 128, %s195, %s184
        $region32: #{tpu_custom_call.1} parent=27 // pred_fallthru
          _
      $region28: #{tpu_custom_call.1} parent=5 // pred_fallthru
        _
      %p198 = scmp.le.s32.totalorder 1, %s17
      %p199 = scmp.lt.s32.totalorder %s17, 3
      %p200 = pnand %p198, %p199
      %p201 = pneg %p200
      // Predicated region
      $region33: #{tpu_custom_call.1} parent=5 // pred_check
        _
      $region34: #{tpu_custom_call.1} parent=5 // pred_check_branch
        %203 = sbr.rel (%p200) target = $region36
      $region35: #{tpu_custom_call.1} parent=5 // pred_region
        %s204 = ssub.s32 %s17, 1
        %s205 = sand.u32 %s30, 1
        %s206 = scalar_lea.sflag [#allocation4], %s205
        %s207 = sand.u32 %s30, 1
        %s208 = smul.addr %s207, 8
        %s209 = scalar_lea.vmem [#allocation3], %s208
        // Predicated region
        $region37: #{tpu_custom_call.1} parent=35 // pred_check
          %p210 = pneg %p43
        $region38: #{tpu_custom_call.1} parent=35 // pred_check_branch
          %212 = sbr.rel (%p210) target = $region40
        $region39: #{tpu_custom_call.1} parent=35 // pred_region
          %213 = dma.done %s206, 128
        $region40: #{tpu_custom_call.1} parent=35 // pred_fallthru
          _
        // Predicated region
        $region41: #{tpu_custom_call.1} parent=35 // pred_check
          %p214 = pneg %p64
        $region42: #{tpu_custom_call.1} parent=35 // pred_check_branch
          %216 = sbr.rel (%p214) target = $region44
        $region43: #{tpu_custom_call.1} parent=35 // pred_region
          %217 = dma.done [#allocation7], 512
        $region44: #{tpu_custom_call.1} parent=35 // pred_fallthru
          _
        // Predicated region
        $region45: #{tpu_custom_call.1} parent=35 // pred_check
          %p218 = pneg %p85
        $region46: #{tpu_custom_call.1} parent=35 // pred_check_branch
          %220 = sbr.rel (%p218) target = $region48
        $region47: #{tpu_custom_call.1} parent=35 // pred_region
          %221 = dma.done [#allocation7], 512
        $region48: #{tpu_custom_call.1} parent=35 // pred_fallthru
          _
        %s222 = sand.u32 %s30, 1
        %s223 = scalar_lea.sflag [#allocation4], %s222
        %s224 = sand.u32 %s30, 1
        %s225 = smul.addr %s224, 8
        %s226 = scalar_lea.vmem [#allocation3], %s225
        %p227 = pneg %p43
        %p228 = pneg %p40
        %p229 = pneg %p64
        %p230 = pneg %p61
        %p231 = pneg %p85
        %p232 = pneg %p82
        %p233 = pneg %p106
        %p234 = pneg %p103
        %p235 = pneg %p132
        %p236 = pneg %p129
        %s237 = sand.u32 %s119, 1
        %s238 = scalar_lea.sflag [#allocation5], %s237
        %s239 = sand.u32 %s119, 1
        %s240 = smul.addr %s239, 8
        %s241 = scalar_lea.vmem [#allocation9], %s240
        %v242 = vld [vmem:[%s209] sm:$0xff]
        %v243 = vld [vmem:[#allocation6] sm:$0xff]
        %v244 = vld [vmem:[#allocation6 + $0x8] sm:$0xff]
        %v245 = vld [vmem:[#allocation6 + $0x10] sm:$0xff]
        %v246 = vld [vmem:[#allocation6 + $0x18] sm:$0xff]
        %vm247 = vcmask 261120
        %v249 = vsel %vm247, %v242, 0
        %251 = vmatprep.subr.mxu0 0.0
        %252 = vmatpush1.msra.mxu0 %v243
        %253 = vmatprep.subr.mxu0 0.0
        %254 = vmatpush1.msra.mxu0 %v244
        %255 = vmatprep.subr.mxu0 0.0
        %256 = vmatpush1.msra.mxu0 %v245
        %257 = vmatprep.subr.mxu0 0.0
        %258 = vmatpush1.msra.mxu0 %v246
        %259 = vmatprep.subr.mxu0 0.0
        %260 = vmatpush1.msra.mxu0 0.0
        %261 = vmatprep.subr.mxu0 0.0
        %262 = vmatpush1.msra.mxu0 0.0
        %263 = vmatprep.subr.mxu0 0.0
        %264 = vmatpush1.msra.mxu0 0.0
        %265 = vmatprep.subr.mxu0 0.0
        %266 = vmatpush1.msra.mxu0 0.0
        %267 = vmatprep.subr.mxu0 0.0
        %268 = vmatpush1.msra.mxu0 0.0
        %269 = vmatprep.subr.mxu0 0.0
        %270 = vmatpush1.msra.mxu0 0.0
        %271 = vmatprep.subr.mxu0 0.0
        %272 = vmatpush1.msra.mxu0 0.0
        %273 = vmatprep.subr.mxu0 0.0
        %274 = vmatpush1.msra.mxu0 0.0
        %275 = vmatprep.subr.mxu0 0.0
        %276 = vmatpush1.msra.mxu0 0.0
        %277 = vmatprep.subr.mxu0 0.0
        %278 = vmatpush1.msra.mxu0 0.0
        %279 = vmatprep.subr.mxu0 0.0
        %280 = vmatpush1.msra.mxu0 0.0
        %281 = vmatprep.subr.mxu0 0.0
        %282 = vmatpush1.msra.mxu0 0.0
        %283 = vmatprep.subr.mxu0 0.0
        %284 = vmatpush1.msra.mxu0 0.0
        %285 = vmatprep.subr.mxu0 0.0
        %286 = vmatpush1.msra.mxu0 0.0
        %287 = vmatprep.subr.mxu0 0.0
        %288 = vmatpush1.msra.mxu0 0.0
        %289 = vmatprep.subr.mxu0 0.0
        %290 = vmatpush1.msra.mxu0 0.0
        %291 = vmatprep.subr.mxu0 0.0
        %292 = vmatpush1.msra.mxu0 0.0
        %293 = vmatprep.subr.mxu0 0.0
        %294 = vmatpush1.msra.mxu0 0.0
        %295 = vmatprep.subr.mxu0 0.0
        %296 = vmatpush1.msra.mxu0 0.0
        %297 = vmatprep.subr.mxu0 0.0
        %298 = vmatpush1.msra.mxu0 0.0
        %299 = vmatprep.subr.mxu0 0.0
        %300 = vmatpush1.msra.mxu0 0.0
        %301 = vmatprep.subr.mxu0 0.0
        %302 = vmatpush1.msra.mxu0 0.0
        %303 = vmatprep.subr.mxu0 0.0
        %304 = vmatpush1.msra.mxu0 0.0
        %305 = vmatprep.subr.mxu0 0.0
        %306 = vmatpush1.msra.mxu0 0.0
        %307 = vmatprep.subr.mxu0 0.0
        %308 = vmatpush1.msra.mxu0 0.0
        %309 = vmatprep.subr.mxu0 0.0
        %310 = vmatpush1.msra.mxu0 0.0
        %311 = vmatprep.subr.mxu0 0.0
        %312 = vmatpush1.msra.mxu0 0.0
        %313 = vmatprep.subr.mxu0 0.0
        %314 = vmatpush1.msra.mxu0 0.0
        %315 = vmatprep.mubr.f32.mxu0 0.0
        %316 = vmatmul.mubr.f32.gmra.mrb[0].mxu0 %v249
        %v317 = vpop.f32.mrb[0].mxu0
        %v318 = vadd.f32 0.0, %v317
        %v319 = vpop.f32.mrb[0].mxu0
        %320 = vdwg.mxu0
        %322 = vrot.lane.b32.xlu0 %v318, 96
        %v323 = vpop.permute.xlu0 %322
        %vm324 = vcmask 64512
        %v325 = vsel %vm324, %v318, 0
        %v327 = vsel %vm324, %v323, 0
        %329 = vmatprep.subr.mxu0 0.0
        %330 = vmatpush1.xpose.msra.mxu0 %v327
        %331 = vmatprep.subr.mxu0 0.0
        %332 = vmatpush1.xpose.msra.mxu0 0.0
        %333 = vmatprep.subr.mxu0 0.0
        %334 = vmatpush1.xpose.msra.mxu0 0.0
        %335 = vmatprep.subr.mxu0 0.0
        %336 = vmatpush1.xpose.msra.mxu0 0.0
        %337 = vmatprep.subr.mxu0 0.0
        %338 = vmatpush1.xpose.msra.mxu0 0.0
        %339 = vmatprep.subr.mxu0 0.0
        %340 = vmatpush1.xpose.msra.mxu0 0.0
        %341 = vmatprep.subr.mxu0 0.0
        %342 = vmatpush1.xpose.msra.mxu0 0.0
        %343 = vmatprep.subr.mxu0 0.0
        %344 = vmatpush1.xpose.msra.mxu0 0.0
        %345 = vmatprep.subr.mxu0 0.0
        %346 = vmatpush1.xpose.msra.mxu0 0.0
        %347 = vmatprep.subr.mxu0 0.0
        %348 = vmatpush1.xpose.msra.mxu0 0.0
        %349 = vmatprep.subr.mxu0 0.0
        %350 = vmatpush1.xpose.msra.mxu0 0.0
        %351 = vmatprep.subr.mxu0 0.0
        %352 = vmatpush1.xpose.msra.mxu0 0.0
        %353 = vmatprep.subr.mxu0 0.0
        %354 = vmatpush1.xpose.msra.mxu0 0.0
        %355 = vmatprep.subr.mxu0 0.0
        %356 = vmatpush1.xpose.msra.mxu0 0.0
        %357 = vmatprep.subr.mxu0 0.0
        %358 = vmatpush1.xpose.msra.mxu0 0.0
        %359 = vmatprep.subr.mxu0 0.0
        %360 = vmatpush1.xpose.msra.mxu0 0.0
        %361 = vmatprep.subr.mxu0 0.0
        %362 = vmatpush1.xpose.msra.mxu0 0.0
        %363 = vmatprep.subr.mxu0 0.0
        %364 = vmatpush1.xpose.msra.mxu0 0.0
        %365 = vmatprep.subr.mxu0 0.0
        %366 = vmatpush1.xpose.msra.mxu0 0.0
        %367 = vmatprep.subr.mxu0 0.0
        %368 = vmatpush1.xpose.msra.mxu0 0.0
        %369 = vmatprep.subr.mxu0 0.0
        %370 = vmatpush1.xpose.msra.mxu0 0.0
        %371 = vmatprep.subr.mxu0 0.0
        %372 = vmatpush1.xpose.msra.mxu0 0.0
        %373 = vmatprep.subr.mxu0 0.0
        %374 = vmatpush1.xpose.msra.mxu0 0.0
        %375 = vmatprep.subr.mxu0 0.0
        %376 = vmatpush1.xpose.msra.mxu0 0.0
        %377 = vmatprep.subr.mxu0 0.0
        %378 = vmatpush1.xpose.msra.mxu0 0.0
        %379 = vmatprep.subr.mxu0 0.0
        %380 = vmatpush1.xpose.msra.mxu0 0.0
        %381 = vmatprep.subr.mxu0 0.0
        %382 = vmatpush1.xpose.msra.mxu0 0.0
        %383 = vmatprep.subr.mxu0 0.0
        %384 = vmatpush1.xpose.msra.mxu0 0.0
        %385 = vmatprep.subr.mxu0 0.0
        %386 = vmatpush1.xpose.msra.mxu0 0.0
        %387 = vmatprep.subr.mxu0 0.0
        %388 = vmatpush1.xpose.msra.mxu0 0.0
        %389 = vmatprep.subr.mxu0 0.0
        %390 = vmatpush1.xpose.msra.mxu0 0.0
        %391 = vmatprep.subr.mxu0 0.0
        %392 = vmatpush1.xpose.msra.mxu0 0.0
        %393 = vmatprep.mubr.f32.mxu0 0.0
        %394 = vmatmul.mubr.f32.gmra.mrb[0].mxu0 %v325
        %v395 = vpop.f32.mrb[0].mxu0
        %v396 = vadd.f32 0.0, %v395
        %v397 = vpop.f32.mrb[0].mxu0
        %398 = vdwg.mxu0
        %v399 = vsel %vm324, %v396, -inf
        %400 = vmax.xlane.f32.xlu0 %v399
        %v401 = vpop.xlane.xlu0 %400
        %v402 = vsub.f32 %v396, %v401
        %v403 = vmul.f32 %v402, 1.442695
        %v404 = vpow.pop %v403
        %v405 = vsel %vm324, %v404, 0.0
        %406 = vadd.xlane.f32.xlu0 %v405
        %v407 = vpop.xlane.xlu0 %406
        %v408 = vrcp.pop %v407
        %v409 = vmul.f32 %v404, %v408
        %410 = vrot.lane.b32.xlu0 %v318, 64
        %v411 = vpop.permute.xlu0 %410
        %v414 = vsel %vm324, %v409, 0
        %416 = vmatprep.subr.mxu0 0.0
        %417 = vmatpush1.msra.mxu0 %v411
        %418 = vmatprep.subr.mxu0 0.0
        %419 = vmatpush1.msra.mxu0 0.0
        %420 = vmatprep.subr.mxu0 0.0
        %421 = vmatpush1.msra.mxu0 0.0
        %422 = vmatprep.subr.mxu0 0.0
        %423 = vmatpush1.msra.mxu0 0.0
        %424 = vmatprep.subr.mxu0 0.0
        %425 = vmatpush1.msra.mxu0 0.0
        %426 = vmatprep.subr.mxu0 0.0
        %427 = vmatpush1.msra.mxu0 0.0
        %428 = vmatprep.subr.mxu0 0.0
        %429 = vmatpush1.msra.mxu0 0.0
        %430 = vmatprep.subr.mxu0 0.0
        %431 = vmatpush1.msra.mxu0 0.0
        %432 = vmatprep.subr.mxu0 0.0
        %433 = vmatpush1.msra.mxu0 0.0
        %434 = vmatprep.subr.mxu0 0.0
        %435 = vmatpush1.msra.mxu0 0.0
        %436 = vmatprep.subr.mxu0 0.0
        %437 = vmatpush1.msra.mxu0 0.0
        %438 = vmatprep.subr.mxu0 0.0
        %439 = vmatpush1.msra.mxu0 0.0
        %440 = vmatprep.subr.mxu0 0.0
        %441 = vmatpush1.msra.mxu0 0.0
        %442 = vmatprep.subr.mxu0 0.0
        %443 = vmatpush1.msra.mxu0 0.0
        %444 = vmatprep.subr.mxu0 0.0
        %445 = vmatpush1.msra.mxu0 0.0
        %446 = vmatprep.subr.mxu0 0.0
        %447 = vmatpush1.msra.mxu0 0.0
        %448 = vmatprep.subr.mxu0 0.0
        %449 = vmatpush1.msra.mxu0 0.0
        %450 = vmatprep.subr.mxu0 0.0
        %451 = vmatpush1.msra.mxu0 0.0
        %452 = vmatprep.subr.mxu0 0.0
        %453 = vmatpush1.msra.mxu0 0.0
        %454 = vmatprep.subr.mxu0 0.0
        %455 = vmatpush1.msra.mxu0 0.0
        %456 = vmatprep.subr.mxu0 0.0
        %457 = vmatpush1.msra.mxu0 0.0
        %458 = vmatprep.subr.mxu0 0.0
        %459 = vmatpush1.msra.mxu0 0.0
        %460 = vmatprep.subr.mxu0 0.0
        %461 = vmatpush1.msra.mxu0 0.0
        %462 = vmatprep.subr.mxu0 0.0
        %463 = vmatpush1.msra.mxu0 0.0
        %464 = vmatprep.subr.mxu0 0.0
        %465 = vmatpush1.msra.mxu0 0.0
        %466 = vmatprep.subr.mxu0 0.0
        %467 = vmatpush1.msra.mxu0 0.0
        %468 = vmatprep.subr.mxu0 0.0
        %469 = vmatpush1.msra.mxu0 0.0
        %470 = vmatprep.subr.mxu0 0.0
        %471 = vmatpush1.msra.mxu0 0.0
        %472 = vmatprep.subr.mxu0 0.0
        %473 = vmatpush1.msra.mxu0 0.0
        %474 = vmatprep.subr.mxu0 0.0
        %475 = vmatpush1.msra.mxu0 0.0
        %476 = vmatprep.subr.mxu0 0.0
        %477 = vmatpush1.msra.mxu0 0.0
        %478 = vmatprep.subr.mxu0 0.0
        %479 = vmatpush1.msra.mxu0 0.0
        %480 = vmatprep.mubr.f32.mxu0 0.0
        %481 = vmatmul.mubr.f32.gmra.mrb[0].mxu0 %v414
        %v482 = vpop.f32.mrb[0].mxu0
        %v483 = vadd.f32 0.0, %v482
        %v484 = vpop.f32.mrb[0].mxu0
        %485 = vdwg.mxu0
        %486 = vst.msk [vmem:[#allocation2] sm:$0xff] %vm324, %v483
        %487 = vrot.lane.b32.xlu0 %v318, 120
        %v488 = vpop.permute.xlu0 %487
        %489 = vrot.lane.b32.xlu0 %v318, 88
        %v490 = vpop.permute.xlu0 %489
        %v491 = vsel %vm324, %v488, 0
        %v493 = vsel %vm324, %v490, 0
        %495 = vmatprep.subr.mxu0 0.0
        %496 = vmatpush1.xpose.msra.mxu0 %v493
        %497 = vmatprep.subr.mxu0 0.0
        %498 = vmatpush1.xpose.msra.mxu0 0.0
        %499 = vmatprep.subr.mxu0 0.0
        %500 = vmatpush1.xpose.msra.mxu0 0.0
        %501 = vmatprep.subr.mxu0 0.0
        %502 = vmatpush1.xpose.msra.mxu0 0.0
        %503 = vmatprep.subr.mxu0 0.0
        %504 = vmatpush1.xpose.msra.mxu0 0.0
        %505 = vmatprep.subr.mxu0 0.0
        %506 = vmatpush1.xpose.msra.mxu0 0.0
        %507 = vmatprep.subr.mxu0 0.0
        %508 = vmatpush1.xpose.msra.mxu0 0.0
        %509 = vmatprep.subr.mxu0 0.0
        %510 = vmatpush1.xpose.msra.mxu0 0.0
        %511 = vmatprep.subr.mxu0 0.0
        %512 = vmatpush1.xpose.msra.mxu0 0.0
        %513 = vmatprep.subr.mxu0 0.0
        %514 = vmatpush1.xpose.msra.mxu0 0.0
        %515 = vmatprep.subr.mxu0 0.0
        %516 = vmatpush1.xpose.msra.mxu0 0.0
        %517 = vmatprep.subr.mxu0 0.0
        %518 = vmatpush1.xpose.msra.mxu0 0.0
        %519 = vmatprep.subr.mxu0 0.0
        %520 = vmatpush1.xpose.msra.mxu0 0.0
        %521 = vmatprep.subr.mxu0 0.0
        %522 = vmatpush1.xpose.msra.mxu0 0.0
        %523 = vmatprep.subr.mxu0 0.0
        %524 = vmatpush1.xpose.msra.mxu0 0.0
        %525 = vmatprep.subr.mxu0 0.0
        %526 = vmatpush1.xpose.msra.mxu0 0.0
        %527 = vmatprep.subr.mxu0 0.0
        %528 = vmatpush1.xpose.msra.mxu0 0.0
        %529 = vmatprep.subr.mxu0 0.0
        %530 = vmatpush1.xpose.msra.mxu0 0.0
        %531 = vmatprep.subr.mxu0 0.0
        %532 = vmatpush1.xpose.msra.mxu0 0.0
        %533 = vmatprep.subr.mxu0 0.0
        %534 = vmatpush1.xpose.msra.mxu0 0.0
        %535 = vmatprep.subr.mxu0 0.0
        %536 = vmatpush1.xpose.msra.mxu0 0.0
        %537 = vmatprep.subr.mxu0 0.0
        %538 = vmatpush1.xpose.msra.mxu0 0.0
        %539 = vmatprep.subr.mxu0 0.0
        %540 = vmatpush1.xpose.msra.mxu0 0.0
        %541 = vmatprep.subr.mxu0 0.0
        %542 = vmatpush1.xpose.msra.mxu0 0.0
        %543 = vmatprep.subr.mxu0 0.0
        %544 = vmatpush1.xpose.msra.mxu0 0.0
        %545 = vmatprep.subr.mxu0 0.0
        %546 = vmatpush1.xpose.msra.mxu0 0.0
        %547 = vmatprep.subr.mxu0 0.0
        %548 = vmatpush1.xpose.msra.mxu0 0.0
        %549 = vmatprep.subr.mxu0 0.0
        %550 = vmatpush1.xpose.msra.mxu0 0.0
        %551 = vmatprep.subr.mxu0 0.0
        %552 = vmatpush1.xpose.msra.mxu0 0.0
        %553 = vmatprep.subr.mxu0 0.0
        %554 = vmatpush1.xpose.msra.mxu0 0.0
        %555 = vmatprep.subr.mxu0 0.0
        %556 = vmatpush1.xpose.msra.mxu0 0.0
        %557 = vmatprep.subr.mxu0 0.0
        %558 = vmatpush1.xpose.msra.mxu0 0.0
        %559 = vmatprep.mubr.f32.mxu0 0.0
        %560 = vmatmul.mubr.f32.gmra.mrb[0].mxu0 %v491
        %v561 = vpop.f32.mrb[0].mxu0
        %v562 = vadd.f32 0.0, %v561
        %v563 = vpop.f32.mrb[0].mxu0
        %564 = vdwg.mxu0
        %v565 = vsel %vm324, %v562, -inf
        %566 = vmax.xlane.f32.xlu0 %v565
        %v567 = vpop.xlane.xlu0 %566
        %v568 = vsub.f32 %v562, %v567
        %v569 = vmul.f32 %v568, 1.442695
        %v570 = vpow.pop %v569
        %v571 = vsel %vm324, %v570, 0.0
        %572 = vadd.xlane.f32.xlu0 %v571
        %v573 = vpop.xlane.xlu0 %572
        %v574 = vrcp.pop %v573
        %v575 = vmul.f32 %v570, %v574
        %576 = vrot.lane.b32.xlu0 %v318, 56
        %v577 = vpop.permute.xlu0 %576
        %v580 = vsel %vm324, %v575, 0
        %582 = vmatprep.subr.mxu0 0.0
        %583 = vmatpush1.msra.mxu0 %v577
        %584 = vmatprep.subr.mxu0 0.0
        %585 = vmatpush1.msra.mxu0 0.0
        %586 = vmatprep.subr.mxu0 0.0
        %587 = vmatpush1.msra.mxu0 0.0
        %588 = vmatprep.subr.mxu0 0.0
        %589 = vmatpush1.msra.mxu0 0.0
        %590 = vmatprep.subr.mxu0 0.0
        %591 = vmatpush1.msra.mxu0 0.0
        %592 = vmatprep.subr.mxu0 0.0
        %593 = vmatpush1.msra.mxu0 0.0
        %594 = vmatprep.subr.mxu0 0.0
        %595 = vmatpush1.msra.mxu0 0.0
        %596 = vmatprep.subr.mxu0 0.0
        %597 = vmatpush1.msra.mxu0 0.0
        %598 = vmatprep.subr.mxu0 0.0
        %599 = vmatpush1.msra.mxu0 0.0
        %600 = vmatprep.subr.mxu0 0.0
        %601 = vmatpush1.msra.mxu0 0.0
        %602 = vmatprep.subr.mxu0 0.0
        %603 = vmatpush1.msra.mxu0 0.0
        %604 = vmatprep.subr.mxu0 0.0
        %605 = vmatpush1.msra.mxu0 0.0
        %606 = vmatprep.subr.mxu0 0.0
        %607 = vmatpush1.msra.mxu0 0.0
        %608 = vmatprep.subr.mxu0 0.0
        %609 = vmatpush1.msra.mxu0 0.0
        %610 = vmatprep.subr.mxu0 0.0
        %611 = vmatpush1.msra.mxu0 0.0
        %612 = vmatprep.subr.mxu0 0.0
        %613 = vmatpush1.msra.mxu0 0.0
        %614 = vmatprep.subr.mxu0 0.0
        %615 = vmatpush1.msra.mxu0 0.0
        %616 = vmatprep.subr.mxu0 0.0
        %617 = vmatpush1.msra.mxu0 0.0
        %618 = vmatprep.subr.mxu0 0.0
        %619 = vmatpush1.msra.mxu0 0.0
        %620 = vmatprep.subr.mxu0 0.0
        %621 = vmatpush1.msra.mxu0 0.0
        %622 = vmatprep.subr.mxu0 0.0
        %623 = vmatpush1.msra.mxu0 0.0
        %624 = vmatprep.subr.mxu0 0.0
        %625 = vmatpush1.msra.mxu0 0.0
        %626 = vmatprep.subr.mxu0 0.0
        %627 = vmatpush1.msra.mxu0 0.0
        %628 = vmatprep.subr.mxu0 0.0
        %629 = vmatpush1.msra.mxu0 0.0
        %630 = vmatprep.subr.mxu0 0.0
        %631 = vmatpush1.msra.mxu0 0.0
        %632 = vmatprep.subr.mxu0 0.0
        %633 = vmatpush1.msra.mxu0 0.0
        %634 = vmatprep.subr.mxu0 0.0
        %635 = vmatpush1.msra.mxu0 0.0
        %636 = vmatprep.subr.mxu0 0.0
        %637 = vmatpush1.msra.mxu0 0.0
        %638 = vmatprep.subr.mxu0 0.0
        %639 = vmatpush1.msra.mxu0 0.0
        %640 = vmatprep.subr.mxu0 0.0
        %641 = vmatpush1.msra.mxu0 0.0
        %642 = vmatprep.subr.mxu0 0.0
        %643 = vmatpush1.msra.mxu0 0.0
        %644 = vmatprep.subr.mxu0 0.0
        %645 = vmatpush1.msra.mxu0 0.0
        %646 = vmatprep.mubr.f32.mxu0 0.0
        %647 = vmatmul.mubr.f32.gmra.mrb[0].mxu0 %v580
        %v648 = vpop.f32.mrb[0].mxu0
        %v649 = vadd.f32 0.0, %v648
        %v650 = vpop.f32.mrb[0].mxu0
        %651 = vdwg.mxu0
        %653 = vrot.lane.b32.xlu0 %v649, 8
        %v654 = vpop.permute.xlu0 %653
        %vm656 = vcmask 130112
        %657 = vst.msk [vmem:[#allocation2] sm:$0xff] %vm656, %v654
        %658 = vrot.lane.b32.xlu0 %v318, 112
        %v659 = vpop.permute.xlu0 %658
        %660 = vrot.lane.b32.xlu0 %v318, 80
        %v661 = vpop.permute.xlu0 %660
        %v662 = vsel %vm324, %v659, 0
        %v664 = vsel %vm324, %v661, 0
        %666 = vmatprep.subr.mxu0 0.0
        %667 = vmatpush1.xpose.msra.mxu0 %v664
        %668 = vmatprep.subr.mxu0 0.0
        %669 = vmatpush1.xpose.msra.mxu0 0.0
        %670 = vmatprep.subr.mxu0 0.0
        %671 = vmatpush1.xpose.msra.mxu0 0.0
        %672 = vmatprep.subr.mxu0 0.0
        %673 = vmatpush1.xpose.msra.mxu0 0.0
        %674 = vmatprep.subr.mxu0 0.0
        %675 = vmatpush1.xpose.msra.mxu0 0.0
        %676 = vmatprep.subr.mxu0 0.0
        %677 = vmatpush1.xpose.msra.mxu0 0.0
        %678 = vmatprep.subr.mxu0 0.0
        %679 = vmatpush1.xpose.msra.mxu0 0.0
        %680 = vmatprep.subr.mxu0 0.0
        %681 = vmatpush1.xpose.msra.mxu0 0.0
        %682 = vmatprep.subr.mxu0 0.0
        %683 = vmatpush1.xpose.msra.mxu0 0.0
        %684 = vmatprep.subr.mxu0 0.0
        %685 = vmatpush1.xpose.msra.mxu0 0.0
        %686 = vmatprep.subr.mxu0 0.0
        %687 = vmatpush1.xpose.msra.mxu0 0.0
        %688 = vmatprep.subr.mxu0 0.0
        %689 = vmatpush1.xpose.msra.mxu0 0.0
        %690 = vmatprep.subr.mxu0 0.0
        %691 = vmatpush1.xpose.msra.mxu0 0.0
        %692 = vmatprep.subr.mxu0 0.0
        %693 = vmatpush1.xpose.msra.mxu0 0.0
        %694 = vmatprep.subr.mxu0 0.0
        %695 = vmatpush1.xpose.msra.mxu0 0.0
        %696 = vmatprep.subr.mxu0 0.0
        %697 = vmatpush1.xpose.msra.mxu0 0.0
        %698 = vmatprep.subr.mxu0 0.0
        %699 = vmatpush1.xpose.msra.mxu0 0.0
        %700 = vmatprep.subr.mxu0 0.0
        %701 = vmatpush1.xpose.msra.mxu0 0.0
        %702 = vmatprep.subr.mxu0 0.0
        %703 = vmatpush1.xpose.msra.mxu0 0.0
        %704 = vmatprep.subr.mxu0 0.0
        %705 = vmatpush1.xpose.msra.mxu0 0.0
        %706 = vmatprep.subr.mxu0 0.0
        %707 = vmatpush1.xpose.msra.mxu0 0.0
        %708 = vmatprep.subr.mxu0 0.0
        %709 = vmatpush1.xpose.msra.mxu0 0.0
        %710 = vmatprep.subr.mxu0 0.0
        %711 = vmatpush1.xpose.msra.mxu0 0.0
        %712 = vmatprep.subr.mxu0 0.0
        %713 = vmatpush1.xpose.msra.mxu0 0.0
        %714 = vmatprep.subr.mxu0 0.0
        %715 = vmatpush1.xpose.msra.mxu0 0.0
        %716 = vmatprep.subr.mxu0 0.0
        %717 = vmatpush1.xpose.msra.mxu0 0.0
        %718 = vmatprep.subr.mxu0 0.0
        %719 = vmatpush1.xpose.msra.mxu0 0.0
        %720 = vmatprep.subr.mxu0 0.0
        %721 = vmatpush1.xpose.msra.mxu0 0.0
        %722 = vmatprep.subr.mxu0 0.0
        %723 = vmatpush1.xpose.msra.mxu0 0.0
        %724 = vmatprep.subr.mxu0 0.0
        %725 = vmatpush1.xpose.msra.mxu0 0.0
        %726 = vmatprep.subr.mxu0 0.0
        %727 = vmatpush1.xpose.msra.mxu0 0.0
        %728 = vmatprep.subr.mxu0 0.0
        %729 = vmatpush1.xpose.msra.mxu0 0.0
        %730 = vmatprep.mubr.f32.mxu0 0.0
        %731 = vmatmul.mubr.f32.gmra.mrb[0].mxu0 %v662
        %v732 = vpop.f32.mrb[0].mxu0
        %v733 = vadd.f32 0.0, %v732
        %v734 = vpop.f32.mrb[0].mxu0
        %735 = vdwg.mxu0
        %v736 = vsel %vm324, %v733, -inf
        %737 = vmax.xlane.f32.xlu0 %v736
        %v738 = vpop.xlane.xlu0 %737
        %v739 = vsub.f32 %v733, %v738
        %v740 = vmul.f32 %v739, 1.442695
        %v741 = vpow.pop %v740
        %v742 = vsel %vm324, %v741, 0.0
        %743 = vadd.xlane.f32.xlu0 %v742
        %v744 = vpop.xlane.xlu0 %743
        %v745 = vrcp.pop %v744
        %v746 = vmul.f32 %v741, %v745
        %747 = vrot.lane.b32.xlu0 %v318, 48
        %v748 = vpop.permute.xlu0 %747
        %v751 = vsel %vm324, %v746, 0
        %753 = vmatprep.subr.mxu0 0.0
        %754 = vmatpush1.msra.mxu0 %v748
        %755 = vmatprep.subr.mxu0 0.0
        %756 = vmatpush1.msra.mxu0 0.0
        %757 = vmatprep.subr.mxu0 0.0
        %758 = vmatpush1.msra.mxu0 0.0
        %759 = vmatprep.subr.mxu0 0.0
        %760 = vmatpush1.msra.mxu0 0.0
        %761 = vmatprep.subr.mxu0 0.0
        %762 = vmatpush1.msra.mxu0 0.0
        %763 = vmatprep.subr.mxu0 0.0
        %764 = vmatpush1.msra.mxu0 0.0
        %765 = vmatprep.subr.mxu0 0.0
        %766 = vmatpush1.msra.mxu0 0.0
        %767 = vmatprep.subr.mxu0 0.0
        %768 = vmatpush1.msra.mxu0 0.0
        %769 = vmatprep.subr.mxu0 0.0
        %770 = vmatpush1.msra.mxu0 0.0
        %771 = vmatprep.subr.mxu0 0.0
        %772 = vmatpush1.msra.mxu0 0.0
        %773 = vmatprep.subr.mxu0 0.0
        %774 = vmatpush1.msra.mxu0 0.0
        %775 = vmatprep.subr.mxu0 0.0
        %776 = vmatpush1.msra.mxu0 0.0
        %777 = vmatprep.subr.mxu0 0.0
        %778 = vmatpush1.msra.mxu0 0.0
        %779 = vmatprep.subr.mxu0 0.0
        %780 = vmatpush1.msra.mxu0 0.0
        %781 = vmatprep.subr.mxu0 0.0
        %782 = vmatpush1.msra.mxu0 0.0
        %783 = vmatprep.subr.mxu0 0.0
        %784 = vmatpush1.msra.mxu0 0.0
        %785 = vmatprep.subr.mxu0 0.0
        %786 = vmatpush1.msra.mxu0 0.0
        %787 = vmatprep.subr.mxu0 0.0
        %788 = vmatpush1.msra.mxu0 0.0
        %789 = vmatprep.subr.mxu0 0.0
        %790 = vmatpush1.msra.mxu0 0.0
        %791 = vmatprep.subr.mxu0 0.0
        %792 = vmatpush1.msra.mxu0 0.0
        %793 = vmatprep.subr.mxu0 0.0
        %794 = vmatpush1.msra.mxu0 0.0
        %795 = vmatprep.subr.mxu0 0.0
        %796 = vmatpush1.msra.mxu0 0.0
        %797 = vmatprep.subr.mxu0 0.0
        %798 = vmatpush1.msra.mxu0 0.0
        %799 = vmatprep.subr.mxu0 0.0
        %800 = vmatpush1.msra.mxu0 0.0
        %801 = vmatprep.subr.mxu0 0.0
        %802 = vmatpush1.msra.mxu0 0.0
        %803 = vmatprep.subr.mxu0 0.0
        %804 = vmatpush1.msra.mxu0 0.0
        %805 = vmatprep.subr.mxu0 0.0
        %806 = vmatpush1.msra.mxu0 0.0
        %807 = vmatprep.subr.mxu0 0.0
        %808 = vmatpush1.msra.mxu0 0.0
        %809 = vmatprep.subr.mxu0 0.0
        %810 = vmatpush1.msra.mxu0 0.0
        %811 = vmatprep.subr.mxu0 0.0
        %812 = vmatpush1.msra.mxu0 0.0
        %813 = vmatprep.subr.mxu0 0.0
        %814 = vmatpush1.msra.mxu0 0.0
        %815 = vmatprep.subr.mxu0 0.0
        %816 = vmatpush1.msra.mxu0 0.0
        %817 = vmatprep.mubr.f32.mxu0 0.0
        %818 = vmatmul.mubr.f32.gmra.mrb[0].mxu0 %v751
        %v819 = vpop.f32.mrb[0].mxu0
        %v820 = vadd.f32 0.0, %v819
        %v821 = vpop.f32.mrb[0].mxu0
        %822 = vdwg.mxu0
        %824 = vrot.lane.b32.xlu0 %v820, 16
        %v825 = vpop.permute.xlu0 %824
        %vm827 = vcmask 195712
        %828 = vst.msk [vmem:[#allocation2] sm:$0xff] %vm827, %v825
        %829 = vrot.lane.b32.xlu0 %v318, 104
        %v830 = vpop.permute.xlu0 %829
        %831 = vrot.lane.b32.xlu0 %v318, 72
        %v832 = vpop.permute.xlu0 %831
        %v833 = vsel %vm324, %v830, 0
        %v835 = vsel %vm324, %v832, 0
        %837 = vmatprep.subr.mxu0 0.0
        %838 = vmatpush1.xpose.msra.mxu0 %v835
        %839 = vmatprep.subr.mxu0 0.0
        %840 = vmatpush1.xpose.msra.mxu0 0.0
        %841 = vmatprep.subr.mxu0 0.0
        %842 = vmatpush1.xpose.msra.mxu0 0.0
        %843 = vmatprep.subr.mxu0 0.0
        %844 = vmatpush1.xpose.msra.mxu0 0.0
        %845 = vmatprep.subr.mxu0 0.0
        %846 = vmatpush1.xpose.msra.mxu0 0.0
        %847 = vmatprep.subr.mxu0 0.0
        %848 = vmatpush1.xpose.msra.mxu0 0.0
        %849 = vmatprep.subr.mxu0 0.0
        %850 = vmatpush1.xpose.msra.mxu0 0.0
        %851 = vmatprep.subr.mxu0 0.0
        %852 = vmatpush1.xpose.msra.mxu0 0.0
        %853 = vmatprep.subr.mxu0 0.0
        %854 = vmatpush1.xpose.msra.mxu0 0.0
        %855 = vmatprep.subr.mxu0 0.0
        %856 = vmatpush1.xpose.msra.mxu0 0.0
        %857 = vmatprep.subr.mxu0 0.0
        %858 = vmatpush1.xpose.msra.mxu0 0.0
        %859 = vmatprep.subr.mxu0 0.0
        %860 = vmatpush1.xpose.msra.mxu0 0.0
        %861 = vmatprep.subr.mxu0 0.0
        %862 = vmatpush1.xpose.msra.mxu0 0.0
        %863 = vmatprep.subr.mxu0 0.0
        %864 = vmatpush1.xpose.msra.mxu0 0.0
        %865 = vmatprep.subr.mxu0 0.0
        %866 = vmatpush1.xpose.msra.mxu0 0.0
        %867 = vmatprep.subr.mxu0 0.0
        %868 = vmatpush1.xpose.msra.mxu0 0.0
        %869 = vmatprep.subr.mxu0 0.0
        %870 = vmatpush1.xpose.msra.mxu0 0.0
        %871 = vmatprep.subr.mxu0 0.0
        %872 = vmatpush1.xpose.msra.mxu0 0.0
        %873 = vmatprep.subr.mxu0 0.0
        %874 = vmatpush1.xpose.msra.mxu0 0.0
        %875 = vmatprep.subr.mxu0 0.0
        %876 = vmatpush1.xpose.msra.mxu0 0.0
        %877 = vmatprep.subr.mxu0 0.0
        %878 = vmatpush1.xpose.msra.mxu0 0.0
        %879 = vmatprep.subr.mxu0 0.0
        %880 = vmatpush1.xpose.msra.mxu0 0.0
        %881 = vmatprep.subr.mxu0 0.0
        %882 = vmatpush1.xpose.msra.mxu0 0.0
        %883 = vmatprep.subr.mxu0 0.0
        %884 = vmatpush1.xpose.msra.mxu0 0.0
        %885 = vmatprep.subr.mxu0 0.0
        %886 = vmatpush1.xpose.msra.mxu0 0.0
        %887 = vmatprep.subr.mxu0 0.0
        %888 = vmatpush1.xpose.msra.mxu0 0.0
        %889 = vmatprep.subr.mxu0 0.0
        %890 = vmatpush1.xpose.msra.mxu0 0.0
        %891 = vmatprep.subr.mxu0 0.0
        %892 = vmatpush1.xpose.msra.mxu0 0.0
        %893 = vmatprep.subr.mxu0 0.0
        %894 = vmatpush1.xpose.msra.mxu0 0.0
        %895 = vmatprep.subr.mxu0 0.0
        %896 = vmatpush1.xpose.msra.mxu0 0.0
        %897 = vmatprep.subr.mxu0 0.0
        %898 = vmatpush1.xpose.msra.mxu0 0.0
        %899 = vmatprep.subr.mxu0 0.0
        %900 = vmatpush1.xpose.msra.mxu0 0.0
        %901 = vmatprep.mubr.f32.mxu0 0.0
        %902 = vmatmul.mubr.f32.gmra.mrb[0].mxu0 %v833
        %v903 = vpop.f32.mrb[0].mxu0
        %v904 = vadd.f32 0.0, %v903
        %v905 = vpop.f32.mrb[0].mxu0
        %906 = vdwg.mxu0
        %v907 = vsel %vm324, %v904, -inf
        %908 = vmax.xlane.f32.xlu0 %v907
        %v909 = vpop.xlane.xlu0 %908
        %v910 = vsub.f32 %v904, %v909
        %v911 = vmul.f32 %v910, 1.442695
        %v912 = vpow.pop %v911
        %v913 = vsel %vm324, %v912, 0.0
        %914 = vadd.xlane.f32.xlu0 %v913
        %v915 = vpop.xlane.xlu0 %914
        %v916 = vrcp.pop %v915
        %v917 = vmul.f32 %v912, %v916
        %918 = vrot.lane.b32.xlu0 %v318, 40
        %v919 = vpop.permute.xlu0 %918
        %v922 = vsel %vm324, %v917, 0
        %924 = vmatprep.subr.mxu0 0.0
        %925 = vmatpush1.msra.mxu0 %v919
        %926 = vmatprep.subr.mxu0 0.0
        %927 = vmatpush1.msra.mxu0 0.0
        %928 = vmatprep.subr.mxu0 0.0
        %929 = vmatpush1.msra.mxu0 0.0
        %930 = vmatprep.subr.mxu0 0.0
        %931 = vmatpush1.msra.mxu0 0.0
        %932 = vmatprep.subr.mxu0 0.0
        %933 = vmatpush1.msra.mxu0 0.0
        %934 = vmatprep.subr.mxu0 0.0
        %935 = vmatpush1.msra.mxu0 0.0
        %936 = vmatprep.subr.mxu0 0.0
        %937 = vmatpush1.msra.mxu0 0.0
        %938 = vmatprep.subr.mxu0 0.0
        %939 = vmatpush1.msra.mxu0 0.0
        %940 = vmatprep.subr.mxu0 0.0
        %941 = vmatpush1.msra.mxu0 0.0
        %942 = vmatprep.subr.mxu0 0.0
        %943 = vmatpush1.msra.mxu0 0.0
        %944 = vmatprep.subr.mxu0 0.0
        %945 = vmatpush1.msra.mxu0 0.0
        %946 = vmatprep.subr.mxu0 0.0
        %947 = vmatpush1.msra.mxu0 0.0
        %948 = vmatprep.subr.mxu0 0.0
        %949 = vmatpush1.msra.mxu0 0.0
        %950 = vmatprep.subr.mxu0 0.0
        %951 = vmatpush1.msra.mxu0 0.0
        %952 = vmatprep.subr.mxu0 0.0
        %953 = vmatpush1.msra.mxu0 0.0
        %954 = vmatprep.subr.mxu0 0.0
        %955 = vmatpush1.msra.mxu0 0.0
        %956 = vmatprep.subr.mxu0 0.0
        %957 = vmatpush1.msra.mxu0 0.0
        %958 = vmatprep.subr.mxu0 0.0
        %959 = vmatpush1.msra.mxu0 0.0
        %960 = vmatprep.subr.mxu0 0.0
        %961 = vmatpush1.msra.mxu0 0.0
        %962 = vmatprep.subr.mxu0 0.0
        %963 = vmatpush1.msra.mxu0 0.0
        %964 = vmatprep.subr.mxu0 0.0
        %965 = vmatpush1.msra.mxu0 0.0
        %966 = vmatprep.subr.mxu0 0.0
        %967 = vmatpush1.msra.mxu0 0.0
        %968 = vmatprep.subr.mxu0 0.0
        %969 = vmatpush1.msra.mxu0 0.0
        %970 = vmatprep.subr.mxu0 0.0
        %971 = vmatpush1.msra.mxu0 0.0
        %972 = vmatprep.subr.mxu0 0.0
        %973 = vmatpush1.msra.mxu0 0.0
        %974 = vmatprep.subr.mxu0 0.0
        %975 = vmatpush1.msra.mxu0 0.0
        %976 = vmatprep.subr.mxu0 0.0
        %977 = vmatpush1.msra.mxu0 0.0
        %978 = vmatprep.subr.mxu0 0.0
        %979 = vmatpush1.msra.mxu0 0.0
        %980 = vmatprep.subr.mxu0 0.0
        %981 = vmatpush1.msra.mxu0 0.0
        %982 = vmatprep.subr.mxu0 0.0
        %983 = vmatpush1.msra.mxu0 0.0
        %984 = vmatprep.subr.mxu0 0.0
        %985 = vmatpush1.msra.mxu0 0.0
        %986 = vmatprep.subr.mxu0 0.0
        %987 = vmatpush1.msra.mxu0 0.0
        %988 = vmatprep.mubr.f32.mxu0 0.0
        %989 = vmatmul.mubr.f32.gmra.mrb[0].mxu0 %v922
        %v990 = vpop.f32.mrb[0].mxu0
        %v991 = vadd.f32 0.0, %v990
        %v992 = vpop.f32.mrb[0].mxu0
        %993 = vdwg.mxu0
        %995 = vrot.lane.b32.xlu0 %v991, 24
        %v996 = vpop.permute.xlu0 %995
        %vm998 = vcmask 261312
        %999 = vst.msk [vmem:[#allocation2] sm:$0xff] %vm998, %v996
        %v1000 = vld [vmem:[#allocation2] sm:$0xff]
        %v1001 = vld [vmem:[#allocation8] sm:$0xff]
        %v1002 = vld [vmem:[#allocation8 + $0x8] sm:$0xff]
        %v1003 = vld [vmem:[#allocation8 + $0x10] sm:$0xff]
        %v1004 = vld [vmem:[#allocation8 + $0x18] sm:$0xff]
        %v1005 = vld [vmem:[%s3] sm:$0x1]
        %v1007 = vlaneseq
        %v1008 = vshrl.u32 %v1007, 7
        %v1009 = vsub.s32 0, %v1008
        %v1010 = vrot.slane %v1005, %v1009
        %v1013 = vsel %vm247, %v1000, 0
        %1015 = vmatprep.subr.mxu0 0.0
        %1016 = vmatpush1.msra.mxu0 %v1001
        %1017 = vmatprep.subr.mxu0 0.0
        %1018 = vmatpush1.msra.mxu0 %v1002
        %1019 = vmatprep.subr.mxu0 0.0
        %1020 = vmatpush1.msra.mxu0 %v1003
        %1021 = vmatprep.subr.mxu0 0.0
        %1022 = vmatpush1.msra.mxu0 %v1004
        %1023 = vmatprep.subr.mxu0 0.0
        %1024 = vmatpush1.msra.mxu0 0.0
        %1025 = vmatprep.subr.mxu0 0.0
        %1026 = vmatpush1.msra.mxu0 0.0
        %1027 = vmatprep.subr.mxu0 0.0
        %1028 = vmatpush1.msra.mxu0 0.0
        %1029 = vmatprep.subr.mxu0 0.0
        %1030 = vmatpush1.msra.mxu0 0.0
        %1031 = vmatprep.subr.mxu0 0.0
        %1032 = vmatpush1.msra.mxu0 0.0
        %1033 = vmatprep.subr.mxu0 0.0
        %1034 = vmatpush1.msra.mxu0 0.0
        %1035 = vmatprep.subr.mxu0 0.0
        %1036 = vmatpush1.msra.mxu0 0.0
        %1037 = vmatprep.subr.mxu0 0.0
        %1038 = vmatpush1.msra.mxu0 0.0
        %1039 = vmatprep.subr.mxu0 0.0
        %1040 = vmatpush1.msra.mxu0 0.0
        %1041 = vmatprep.subr.mxu0 0.0
        %1042 = vmatpush1.msra.mxu0 0.0
        %1043 = vmatprep.subr.mxu0 0.0
        %1044 = vmatpush1.msra.mxu0 0.0
        %1045 = vmatprep.subr.mxu0 0.0
        %1046 = vmatpush1.msra.mxu0 0.0
        %1047 = vmatprep.subr.mxu0 0.0
        %1048 = vmatpush1.msra.mxu0 0.0
        %1049 = vmatprep.subr.mxu0 0.0
        %1050 = vmatpush1.msra.mxu0 0.0
        %1051 = vmatprep.subr.mxu0 0.0
        %1052 = vmatpush1.msra.mxu0 0.0
        %1053 = vmatprep.subr.mxu0 0.0
        %1054 = vmatpush1.msra.mxu0 0.0
        %1055 = vmatprep.subr.mxu0 0.0
        %1056 = vmatpush1.msra.mxu0 0.0
        %1057 = vmatprep.subr.mxu0 0.0
        %1058 = vmatpush1.msra.mxu0 0.0
        %1059 = vmatprep.subr.mxu0 0.0
        %1060 = vmatpush1.msra.mxu0 0.0
        %1061 = vmatprep.subr.mxu0 0.0
        %1062 = vmatpush1.msra.mxu0 0.0
        %1063 = vmatprep.subr.mxu0 0.0
        %1064 = vmatpush1.msra.mxu0 0.0
        %1065 = vmatprep.subr.mxu0 0.0
        %1066 = vmatpush1.msra.mxu0 0.0
        %1067 = vmatprep.subr.mxu0 0.0
        %1068 = vmatpush1.msra.mxu0 0.0
        %1069 = vmatprep.subr.mxu0 0.0
        %1070 = vmatpush1.msra.mxu0 0.0
        %1071 = vmatprep.subr.mxu0 0.0
        %1072 = vmatpush1.msra.mxu0 0.0
        %1073 = vmatprep.subr.mxu0 0.0
        %1074 = vmatpush1.msra.mxu0 0.0
        %1075 = vmatprep.subr.mxu0 0.0
        %1076 = vmatpush1.msra.mxu0 0.0
        %1077 = vmatprep.subr.mxu0 0.0
        %1078 = vmatpush1.msra.mxu0 0.0
        %1079 = vmatprep.mubr.f32.mxu0 0.0
        %1080 = vmatmul.mubr.f32.gmra.mrb[0].mxu0 %v1013
        %v1081 = vpop.f32.mrb[0].mxu0
        %v1082 = vadd.f32 %v1010, %v1081
        %v1083 = vpop.f32.mrb[0].mxu0
        %1084 = vdwg.mxu0
        %1085 = vst.msk [vmem:[%s241] sm:$0xff] %vm247, %v1082
        %s1086 = sand.u32 %s119, 1
        %s1087 = scalar_lea.sflag [#allocation5], %s1086
        %s1088 = sand.u32 %s119, 1
        %s1089 = smul.addr %s1088, 8
        %s1090 = scalar_lea.vmem [#allocation9], %s1089
        // Predicated region
        $region49: #{tpu_custom_call.1} parent=35 // pred_check
          %p1091 = pneg %p129
        $region50: #{tpu_custom_call.1} parent=35 // pred_check_branch
          %1093 = sbr.rel (%p1091) target = $region52
        $region51: #{tpu_custom_call.1} parent=35 // pred_region
          %s1095 = ssub.s32 128, 128
          %1096 = vsyncadd %s1087, %s1095
          %s1097 = smul.addr %s22, 128
          %s1098 = scalar_lea.hbm %s4, %s1097
          %s1100 = sshll.u32 %s1090, 4
          %s1101 = int_to_ptr.vmem [resolvable:$true] %s1100
          %1103 = dma.vmem_to_hbm [thread:$0]  %s1101, 128, %s1098, %s1087
        $region52: #{tpu_custom_call.1} parent=35 // pred_fallthru
          _
      $region36: #{tpu_custom_call.1} parent=5 // pred_fallthru
        _
      %p1104 = scmp.le.s32.totalorder 2, %s17
      // Predicated region
      $region53: #{tpu_custom_call.1} parent=5 // pred_check
        %p1105 = pneg %p1104
      $region54: #{tpu_custom_call.1} parent=5 // pred_check_branch
        %1107 = sbr.rel (%p1105) target = $region56
      $region55: #{tpu_custom_call.1} parent=5 // pred_region
        %s1108 = ssub.s32 %s17, 2
        // Predicated region
        $region57: #{tpu_custom_call.1} parent=55 // pred_check
          %p1109 = pneg %p135
        $region58: #{tpu_custom_call.1} parent=55 // pred_check_branch
          %1111 = sbr.rel (%p1109) target = $region60
        $region59: #{tpu_custom_call.1} parent=55 // pred_region
          %s1112 = sand.u32 %s120, 1
          %s1113 = scalar_lea.sflag [#allocation5], %s1112
          %s1114 = sand.u32 %s120, 1
          %s1115 = smul.addr %s1114, 8
          %s1116 = scalar_lea.vmem [#allocation9], %s1115
          %1117 = dma.done %s1113, 128
        $region60: #{tpu_custom_call.1} parent=55 // pred_fallthru
          _
      $region56: #{tpu_custom_call.1} parent=5 // pred_fallthru
        _
    $region6: #{tpu_custom_call.1} parent=1 // loop_footer
      %s21 = sadd.s32 1, %s17
    $region7: #{tpu_custom_call.1} parent=1 // loop_footer_branch
      %16 = sbr.rel target = $region3
    $region8: #{tpu_custom_call.1} parent=1 // loop_exit
      _
    %1118 = vsyncpa [#allocation4], 1
    %s1119 = scalar_lea.sflag [#allocation4], 1
    %1120 = vsyncpa %s1119, 1
    %1121 = vsyncpa [#allocation7], 1
    %1122 = vsyncpa [#allocation5], 1
    %s1123 = scalar_lea.sflag [#allocation5], 1
    %1124 = vsyncpa %s1123, 1

</llo_original>
